<compile_context>
chip_gen: v6e
topology: v6e:2x2x1
jax: 0.10.0
libtpu: 0.0.40
codegen_flags: <defaults>
</compile_context>

<pallas_src>
import jax
import jax.numpy as jnp
from jax.experimental import pallas as pl
from jax.experimental.pallas import tpu as pltpu

_LANE = 128        # lane width: hidden dim padded to this for dense MXU tiles
_SUBLANE = 8       # sublane granularity for the batch (second-to-last) dim
_SMALL_BATCH = 128 # below this, plain jnp beats a pallas_call launch
_MAX_TB = 2048     # keeps the f32 (TB, H_p) hidden temp <= 1 MiB


def _round_up(n, m):
    return ((n + m - 1) // m) * m


def _sigmoid(z):
    # Single EUP op per vreg (tanh) instead of exp + reciprocal; exact.
    return 0.5 * jnp.tanh(0.5 * z) + 0.5


def _mlp_kernel(x_ref, w1_ref, b1_ref, w2_ref, b2_ref, o_ref):
    # Cast x to bf16 in-kernel (avoids a separate XLA pad/cast pass over HBM).
    x = x_ref[...].astype(jnp.bfloat16)
    # Hidden layer: sigmoid(x @ W1 + b1); bf16 MXU operands, f32 accumulation.
    h = jnp.dot(x, w1_ref[...], preferred_element_type=jnp.float32)
    h = _sigmoid(h + b1_ref[...])                    # f32 elementwise (v5e-safe)
    # Output layer: sigmoid(h @ W2 + b2).  Padded H rows of W2 are zero, so the
    # 0.5 values in padded hidden lanes contribute nothing.  h -> bf16 is an
    # intentional, tolerance-covered precision trade for the MXU.
    y = jnp.dot(h.astype(jnp.bfloat16), w2_ref[...],
                preferred_element_type=jnp.float32)
    y = _sigmoid(y + b2_ref[...])
    o_ref[...] = y.astype(o_ref.dtype)


def prepare_params(w1, b1, w2, b2):
    """One-time parameter prep (call once, NOT per forward).

    Accepts PyTorch nn.Linear layout (w: [out, in], b: [out]).
    """
    H, D_in = w1.shape
    D_out = w2.shape[0]
    H_p = _round_up(H, _LANE)

    w1_t = jnp.asarray(w1, jnp.float32).T                     # [D_in, H]
    w2_t = jnp.asarray(w2, jnp.float32).T                     # [H, D_out]
    b1_f = jnp.asarray(b1, jnp.float32)
    b2_f = jnp.asarray(b2, jnp.float32)

    w1_p = jnp.zeros((D_in, H_p), jnp.float32).at[:, :H].set(w1_t)
    w2_p = jnp.zeros((H_p, D_out), jnp.float32).at[:H, :].set(w2_t)
    b1_p = jnp.zeros((1, H_p), jnp.float32).at[0, :H].set(b1_f)

    return {
        # Pallas path (bf16 MXU operands, f32 biases, hidden dim lane-padded):
        "w1": w1_p.astype(jnp.bfloat16),      # [D_in, H_p]
        "b1": b1_p,                           # [1, H_p]
        "w2": w2_p.astype(jnp.bfloat16),      # [H_p, D_out]  (real D_out width)
        "b2": b2_f.reshape(1, D_out),         # [1, D_out]
        # Tiny-batch jnp fallback (full f32, unpadded):
        "w1_f32": w1_t, "b1_f32": b1_f, "w2_f32": w2_t, "b2_f32": b2_f,
    }


@jax.jit
def _forward_small(x, w1_t, b1, w2_t, b2):
    # B <= _SMALL_BATCH: a pallas_call launch + tiling overhead dwarfs the work.
    h = jax.nn.sigmoid(jnp.dot(x, w1_t) + b1)
    return jax.nn.sigmoid(jnp.dot(h, w2_t) + b2)


@jax.jit
def _forward_pallas(x, w1, b1, w2, b2):
    B, D_in = x.shape
    H_p = w1.shape[1]
    D_out = w2.shape[1]

    # Batch tile: big enough to amortize the ~0.35 us/step overhead, small
    # enough to keep the f32 hidden temp <= 1 MiB, and always >= 2 grid steps
    # for non-tiny B so v7x's two TensorCores both engage ("parallel" axis).
    if B <= 2 * _SUBLANE:
        TB = _round_up(B, _SUBLANE)
    else:
        TB = min(_MAX_TB, _round_up(-(-B // 2), _SUBLANE))
    grid = -(-B // TB)   # cdiv; final block may be partial (masked on write)

    return pl.pallas_call(
        _mlp_kernel,
        out_shape=jax.ShapeDtypeStruct((B, D_out), jnp.float32),
        grid=(grid,),
        in_specs=[
            pl.BlockSpec((TB, D_in), lambda i: (i, 0)),      # x: streamed
            pl.BlockSpec((D_in, H_p), lambda i: (0, 0)),     # weights / biases
            pl.BlockSpec((1, H_p), lambda i: (0, 0)),        # stay VMEM-resident
            pl.BlockSpec((H_p, D_out), lambda i: (0, 0)),    # across all steps
            pl.BlockSpec((1, D_out), lambda i: (0, 0)),
        ],
        out_specs=pl.BlockSpec((TB, D_out), lambda i: (i, 0)),  # real-width store
        compiler_params=pltpu.CompilerParams(
            dimension_semantics=("parallel",),   # shard batch tiles across TCs
        ),
    )(x.astype(jnp.float32), w1, b1, w2, b2)


def net_forward(x, params):
    if x.shape[0] <= _SMALL_BATCH:
        return _forward_small(x, params["w1_f32"], params["b1_f32"],
                              params["w2_f32"], params["b2_f32"])
    return _forward_pallas(x, params["w1"], params["b1"],
                           params["w2"], params["b2"])


if __name__ == "__main__":
    # Small shapes consistent with the module's forward (Linear -> sigmoid x2).
    D_in, H, D_out = 4, 32, 3

    key = jax.random.PRNGKey(0)
    kx, kw1, kb1, kw2, kb2 = jax.random.split(key, 5)

    # Deterministic parameters in PyTorch nn.Linear layout ([out, in]).
    w1 = jax.random.normal(kw1, (H, D_in), dtype=jnp.float32) * 0.5
    b1 = jax.random.normal(kb1, (H,), dtype=jnp.float32) * 0.1
    w2 = jax.random.normal(kw2, (D_out, H), dtype=jnp.float32) * 0.5
    b2 = jax.random.normal(kb2, (D_out,), dtype=jnp.float32) * 0.1

    params = prepare_params(w1, b1, w2, b2)   # one-time prep

    def ref_fn(xs):
        return jax.nn.sigmoid(jax.nn.sigmoid(xs @ w1.T + b1) @ w2.T + b2)

    # 1) Pallas path, 2 grid steps (megacore-friendly), exact multiple of TB.
    x1 = jax.random.normal(kx, (256, D_in), dtype=jnp.float32)
    o1 = jax.block_until_ready(_forward_pallas(x1, params["w1"], params["b1"],
                                               params["w2"], params["b2"]))
    assert o1.shape == (256, D_out)
    assert jnp.allclose(o1, ref_fn(x1), atol=2e-2, rtol=2e-2)

    # 2) Pallas path with a partial final block (B not a multiple of TB).
    x2 = jax.random.normal(kx, (1000, D_in), dtype=jnp.float32)
    o2 = jax.block_until_ready(net_forward(x2, params))
    assert o2.shape == (1000, D_out)
    assert jnp.allclose(o2, ref_fn(x2), atol=2e-2, rtol=2e-2)

    # 3) Tiny batch: jnp fallback path (full f32, tight tolerance).
    x3 = jax.random.normal(kx, (8, D_in), dtype=jnp.float32)
    o3 = jax.block_until_ready(net_forward(x3, params))
    assert o3.shape == (8, D_out)
    assert jnp.allclose(o3, ref_fn(x3), atol=1e-5, rtol=1e-5)

    print("KERNEL_OK")
</pallas_src>

<mosaic_0001>
module attributes {stable_mosaic.version = 11 : i64} {
  func.func @_mlp_kernel(%arg0: i32, %arg1: memref<128x4xf32, #tpu.memory_space<vmem>>, %arg2: memref<4x128xbf16, #tpu.memory_space<vmem>>, %arg3: memref<1x128xf32, #tpu.memory_space<vmem>>, %arg4: memref<128x3xbf16, #tpu.memory_space<vmem>>, %arg5: memref<1x3xf32, #tpu.memory_space<vmem>>, %arg6: memref<128x3xf32, #tpu.memory_space<vmem>>) attributes {dimension_semantics = [#tpu.dimension_semantics<parallel>], iteration_bounds = array<i64: 2>, scalar_prefetch = 0 : i64, scratch_operands = 0 : i64, tpu.core_type = #tpu.core_type<tc>, window_params = [{transform_indices = @transform_0, window_bounds = array<i64: 128, 4>}, {pipeline_mode = #tpu.pipeline_mode<synchronous>, transform_indices = @transform_1, window_bounds = array<i64: 4, 128>}, {pipeline_mode = #tpu.pipeline_mode<synchronous>, transform_indices = @transform_2, window_bounds = array<i64: 1, 128>}, {pipeline_mode = #tpu.pipeline_mode<synchronous>, transform_indices = @transform_3, window_bounds = array<i64: 128, 3>}, {pipeline_mode = #tpu.pipeline_mode<synchronous>, transform_indices = @transform_4, window_bounds = array<i64: 1, 3>}, {transform_indices = @transform_5, window_bounds = array<i64: 128, 3>}]} {
    %c0 = arith.constant 0 : index
    %c0_0 = arith.constant 0 : index
    %0 = vector.load %arg1[%c0, %c0_0] : memref<128x4xf32, #tpu.memory_space<vmem>>, vector<128x4xf32>
    %1 = arith.truncf %0 : vector<128x4xf32> to vector<128x4xbf16>
    %c0_1 = arith.constant 0 : index
    %c0_2 = arith.constant 0 : index
    %2 = vector.load %arg2[%c0_1, %c0_2] : memref<4x128xbf16, #tpu.memory_space<vmem>>, vector<4x128xbf16>
    %cst = arith.constant dense<0.000000e+00> : vector<128x128xf32>
    %3 = tpu.matmul %1, %2, %cst {dimension_numbers = #tpu.dot_dimension_numbers<[1], [0], [0], [1], [0, 0, 1, 1], [], []>} : vector<128x4xbf16>, vector<4x128xbf16>, vector<128x128xf32> -> vector<128x128xf32>
    %c0_3 = arith.constant 0 : index
    %c0_4 = arith.constant 0 : index
    %4 = vector.load %arg3[%c0_3, %c0_4] : memref<1x128xf32, #tpu.memory_space<vmem>>, vector<1x128xf32>
    %5 = vector.broadcast %4 : vector<1x128xf32> to vector<128x128xf32>
    %6 = arith.addf %3, %5 : vector<128x128xf32>
    %cst_5 = arith.constant 5.000000e-01 : f32
    %7 = vector.broadcast %cst_5 : f32 to vector<128x128xf32>
    %8 = arith.mulf %7, %6 : vector<128x128xf32>
    %9 = math.tanh %8 : vector<128x128xf32>
    %cst_6 = arith.constant 5.000000e-01 : f32
    %10 = vector.broadcast %cst_6 : f32 to vector<128x128xf32>
    %11 = arith.mulf %10, %9 : vector<128x128xf32>
    %cst_7 = arith.constant 5.000000e-01 : f32
    %12 = vector.broadcast %cst_7 : f32 to vector<128x128xf32>
    %13 = arith.addf %11, %12 : vector<128x128xf32>
    %14 = arith.truncf %13 : vector<128x128xf32> to vector<128x128xbf16>
    %c0_8 = arith.constant 0 : index
    %c0_9 = arith.constant 0 : index
    %15 = vector.load %arg4[%c0_8, %c0_9] : memref<128x3xbf16, #tpu.memory_space<vmem>>, vector<128x3xbf16>
    %cst_10 = arith.constant dense<0.000000e+00> : vector<128x3xf32>
    %16 = tpu.matmul %14, %15, %cst_10 {dimension_numbers = #tpu.dot_dimension_numbers<[1], [0], [0], [1], [0, 0, 1, 1], [], []>} : vector<128x128xbf16>, vector<128x3xbf16>, vector<128x3xf32> -> vector<128x3xf32>
    %c0_11 = arith.constant 0 : index
    %c0_12 = arith.constant 0 : index
    %17 = vector.load %arg5[%c0_11, %c0_12] : memref<1x3xf32, #tpu.memory_space<vmem>>, vector<1x3xf32>
    %18 = vector.broadcast %17 : vector<1x3xf32> to vector<128x3xf32>
    %19 = arith.addf %16, %18 : vector<128x3xf32>
    %cst_13 = arith.constant 5.000000e-01 : f32
    %20 = vector.broadcast %cst_13 : f32 to vector<128x3xf32>
    %21 = arith.mulf %20, %19 : vector<128x3xf32>
    %22 = math.tanh %21 : vector<128x3xf32>
    %cst_14 = arith.constant 5.000000e-01 : f32
    %23 = vector.broadcast %cst_14 : f32 to vector<128x3xf32>
    %24 = arith.mulf %23, %22 : vector<128x3xf32>
    %cst_15 = arith.constant 5.000000e-01 : f32
    %25 = vector.broadcast %cst_15 : f32 to vector<128x3xf32>
    %26 = arith.addf %24, %25 : vector<128x3xf32>
    %c0_16 = arith.constant 0 : index
    %c0_17 = arith.constant 0 : index
    %27 = vector.load %arg6[%c0_16, %c0_17] : memref<128x3xf32, #tpu.memory_space<vmem>>, vector<128x3xf32>
    tpu.vector_store %arg6[%c0_16, %c0_17], %26 {strides = array<i32>} : memref<128x3xf32, #tpu.memory_space<vmem>>, vector<128x3xf32>,
    return
  }
  func.func @transform_0(%arg0: i32) -> (i32, i32) {
    %c0_i32 = arith.constant 0 : i32
    %c0_i32_0 = arith.constant 0 : i32
    return %arg0, %c0_i32 : i32, i32
  }
  func.func @transform_1(%arg0: i32) -> (i32, i32) {
    %c0_i32 = arith.constant 0 : i32
    %c0_i32_0 = arith.constant 0 : i32
    %c0_i32_1 = arith.constant 0 : i32
    return %c0_i32, %c0_i32_0 : i32, i32
  }
  func.func @transform_2(%arg0: i32) -> (i32, i32) {
    %c0_i32 = arith.constant 0 : i32
    %c0_i32_0 = arith.constant 0 : i32
    %c0_i32_1 = arith.constant 0 : i32
    return %c0_i32, %c0_i32_0 : i32, i32
  }
  func.func @transform_3(%arg0: i32) -> (i32, i32) {
    %c0_i32 = arith.constant 0 : i32
    %c0_i32_0 = arith.constant 0 : i32
    %c0_i32_1 = arith.constant 0 : i32
    return %c0_i32, %c0_i32_0 : i32, i32
  }
  func.func @transform_4(%arg0: i32) -> (i32, i32) {
    %c0_i32 = arith.constant 0 : i32
    %c0_i32_0 = arith.constant 0 : i32
    %c0_i32_1 = arith.constant 0 : i32
    return %c0_i32, %c0_i32_0 : i32, i32
  }
  func.func @transform_5(%arg0: i32) -> (i32, i32) {
    %c0_i32 = arith.constant 0 : i32
    %c0_i32_0 = arith.constant 0 : i32
    return %arg0, %c0_i32 : i32, i32
  }
}

</mosaic_0001>

<llo_original>
// kernel: _forward_pallas.1
$region0: #{_forward_pallas.1}
  #allocation0 [shape = 'u32[]', space=smem, size = 0x4, offset = 0x4, fixed_abs, tag = 'smem constant byte address 0x4 - core index']
  #allocation1 [shape = 'u32[144,128]{1,0:T(1,128)}', space=vmem, size = 0x12000, scoped, tag = 'internal scratch']
  %s0 = inlined_call_operand.vmem [shape: f32[256,4], index: 0, kind: input, shape index: {}]
  %s1 = inlined_call_operand.vmem [shape: bf16[4,128], index: 1, kind: input, shape index: {}]
  %s2 = inlined_call_operand.vmem [shape: f32[1,128], index: 2, kind: input, shape index: {}]
  %s3 = inlined_call_operand.vmem [shape: bf16[128,3], index: 3, kind: input, shape index: {}]
  %s4 = inlined_call_operand.vmem [shape: f32[1,3], index: 4, kind: input, shape index: {}]
  %s5 = inlined_call_operand.vmem [shape: f32[256,3], index: 5, kind: output, shape index: {}]
  %s6 = sld [smem:[#allocation0]]
  $region53: #{_forward_pallas.1} parent=0
    _
  %s8 = ssub.s32 1, %s6
  %s9 = scalar_select 0, %s8, %s6
  loop: start=0, step=1, limit=4
  $region2: #{_forward_pallas.1} parent=0 // loop_pre_header
    _
  $region3: #{_forward_pallas.1} parent=0 // loop_header
    %s11 = sphi 0, %s15
    %p12 = scmp.ge.s32.totalorder %s11, 4
    %s21 = sphi 0, %s23
    %s24 = sphi 0, %s21
    %s25 = sphi 0, %s24
    %s41 = sphi 0, %s25
    %s45 = sphi 0, %s45
    %s47 = sphi 0, %s45
    %s48 = sphi 0, %s47
    %s62 = sphi 0, %s48
    %s66 = sphi 0, %s66
    %s68 = sphi 0, %s66
    %s69 = sphi 0, %s68
    %s83 = sphi 0, %s69
    %s87 = sphi 0, %s87
    %s89 = sphi 0, %s87
    %s90 = sphi 0, %s89
    %s104 = sphi 0, %s90
    %s108 = sphi 0, %s108
    %s110 = sphi 0, %s108
    %s111 = sphi 0, %s110
    %s125 = sphi 0, %s111
    %s131 = sphi 0, %s133
    %s134 = sphi 0, %s131
    %s135 = sphi 0, %s134
    %s151 = sphi 0, %s135
  $region4: #{_forward_pallas.1} parent=0 // loop_header_branch
    %14 = sbr.rel (%p12) target = $region8
  $region5: #{_forward_pallas.1} parent=0 // loop_body
    %s16 = ssub.s32 %s11, 1
    %s17 = ssub.s32 %s11, 2
    %s18 = sadd.s32 %s11, 1
    %s19 = ssub.s32 %s11, %s18
    %p20 = scmp.eq.s32.totalorder %s19, 0
    %s22 = sadd.s32 %s21, 1
    %s23 = scalar_select %p20, %s21, %s22
    %p26 = pneg %p20
    %p27 = scmp.eq.s32.totalorder %s11, 1
    %p28 = por %p26, %p27
    %p29 = scmp.ne.s32.totalorder %s21, %s24
    %p30 = scmp.eq.s32.totalorder %s11, 0
    %p31 = por %p29, %p30
    %p32 = scmp.ne.s32.totalorder %s21, %s24
    %p33 = scmp.eq.s32.totalorder %s16, 1
    %p34 = por %p32, %p33
    %p35 = scmp.ne.s32.totalorder %s24, %s25
    %p36 = scmp.eq.s32.totalorder %s16, 0
    %p37 = por %p35, %p36
    %p38 = scmp.ne.s32.totalorder %s24, %s25
    %p39 = scmp.eq.s32.totalorder %s17, 1
    %p40 = por %p38, %p39
    %p42 = scmp.ne.s32.totalorder %s25, %s41
    %p43 = scmp.eq.s32.totalorder %s17, 0
    %p44 = por %p42, %p43
    %s46 = sadd.s32 %s45, 1
    %p49 = scmp.eq.s32.totalorder %s11, 1
    %p50 = scmp.ne.s32.totalorder %s45, %s47
    %p51 = scmp.eq.s32.totalorder %s11, 0
    %p52 = por %p50, %p51
    %p53 = scmp.ne.s32.totalorder %s45, %s47
    %p54 = scmp.eq.s32.totalorder %s16, 1
    %p55 = por %p53, %p54
    %p56 = scmp.ne.s32.totalorder %s47, %s48
    %p57 = scmp.eq.s32.totalorder %s16, 0
    %p58 = por %p56, %p57
    %p59 = scmp.ne.s32.totalorder %s47, %s48
    %p60 = scmp.eq.s32.totalorder %s17, 1
    %p61 = por %p59, %p60
    %p63 = scmp.ne.s32.totalorder %s48, %s62
    %p64 = scmp.eq.s32.totalorder %s17, 0
    %p65 = por %p63, %p64
    %s67 = sadd.s32 %s66, 1
    %p70 = scmp.eq.s32.totalorder %s11, 1
    %p71 = scmp.ne.s32.totalorder %s66, %s68
    %p72 = scmp.eq.s32.totalorder %s11, 0
    %p73 = por %p71, %p72
    %p74 = scmp.ne.s32.totalorder %s66, %s68
    %p75 = scmp.eq.s32.totalorder %s16, 1
    %p76 = por %p74, %p75
    %p77 = scmp.ne.s32.totalorder %s68, %s69
    %p78 = scmp.eq.s32.totalorder %s16, 0
    %p79 = por %p77, %p78
    %p80 = scmp.ne.s32.totalorder %s68, %s69
    %p81 = scmp.eq.s32.totalorder %s17, 1
    %p82 = por %p80, %p81
    %p84 = scmp.ne.s32.totalorder %s69, %s83
    %p85 = scmp.eq.s32.totalorder %s17, 0
    %p86 = por %p84, %p85
    %s88 = sadd.s32 %s87, 1
    %p91 = scmp.eq.s32.totalorder %s11, 1
    %p92 = scmp.ne.s32.totalorder %s87, %s89
    %p93 = scmp.eq.s32.totalorder %s11, 0
    %p94 = por %p92, %p93
    %p95 = scmp.ne.s32.totalorder %s87, %s89
    %p96 = scmp.eq.s32.totalorder %s16, 1
    %p97 = por %p95, %p96
    %p98 = scmp.ne.s32.totalorder %s89, %s90
    %p99 = scmp.eq.s32.totalorder %s16, 0
    %p100 = por %p98, %p99
    %p101 = scmp.ne.s32.totalorder %s89, %s90
    %p102 = scmp.eq.s32.totalorder %s17, 1
    %p103 = por %p101, %p102
    %p105 = scmp.ne.s32.totalorder %s90, %s104
    %p106 = scmp.eq.s32.totalorder %s17, 0
    %p107 = por %p105, %p106
    %s109 = sadd.s32 %s108, 1
    %p112 = scmp.eq.s32.totalorder %s11, 1
    %p113 = scmp.ne.s32.totalorder %s108, %s110
    %p114 = scmp.eq.s32.totalorder %s11, 0
    %p115 = por %p113, %p114
    %p116 = scmp.ne.s32.totalorder %s108, %s110
    %p117 = scmp.eq.s32.totalorder %s16, 1
    %p118 = por %p116, %p117
    %p119 = scmp.ne.s32.totalorder %s110, %s111
    %p120 = scmp.eq.s32.totalorder %s16, 0
    %p121 = por %p119, %p120
    %p122 = scmp.ne.s32.totalorder %s110, %s111
    %p123 = scmp.eq.s32.totalorder %s17, 1
    %p124 = por %p122, %p123
    %p126 = scmp.ne.s32.totalorder %s111, %s125
    %p127 = scmp.eq.s32.totalorder %s17, 0
    %p128 = por %p126, %p127
    %s129 = ssub.s32 %s11, %s18
    %p130 = scmp.eq.s32.totalorder %s129, 0
    %s132 = sadd.s32 %s131, 1
    %s133 = scalar_select %p130, %s131, %s132
    %p136 = pneg %p130
    %p137 = scmp.eq.s32.totalorder %s11, 1
    %p138 = por %p136, %p137
    %p139 = scmp.ne.s32.totalorder %s131, %s134
    %p140 = scmp.eq.s32.totalorder %s11, 0
    %p141 = por %p139, %p140
    %p142 = scmp.ne.s32.totalorder %s131, %s134
    %p143 = scmp.eq.s32.totalorder %s16, 1
    %p144 = por %p142, %p143
    %p145 = scmp.ne.s32.totalorder %s134, %s135
    %p146 = scmp.eq.s32.totalorder %s16, 0
    %p147 = por %p145, %p146
    %p148 = scmp.ne.s32.totalorder %s134, %s135
    %p149 = scmp.eq.s32.totalorder %s17, 1
    %p150 = por %p148, %p149
    %p152 = scmp.ne.s32.totalorder %s135, %s151
    %p153 = scmp.eq.s32.totalorder %s17, 0
    %p154 = por %p152, %p153
    %p155 = scmp.le.s32.totalorder 1, %s11
    %p156 = scmp.lt.s32.totalorder %s11, 3
    %p157 = pnand %p155, %p156
    %p158 = pneg %p157
    // Predicated region
    $region9: #{_forward_pallas.1} parent=5 // pred_check
      _
    $region10: #{_forward_pallas.1} parent=5 // pred_check_branch
      %160 = sbr.rel (%p157) target = $region12
    $region11: #{_forward_pallas.1} parent=5 // pred_region
      %s161 = ssub.s32 %s11, 1
      // Predicated region
      $region13: #{_forward_pallas.1} parent=11 // pred_check
        %p162 = pneg %p58
      $region14: #{_forward_pallas.1} parent=11 // pred_check_branch
        %164 = sbr.rel (%p162) target = $region16
      $region15: #{_forward_pallas.1} parent=11 // pred_region
        _
      $region16: #{_forward_pallas.1} parent=11 // pred_fallthru
        _
      // Predicated region
      $region17: #{_forward_pallas.1} parent=11 // pred_check
        %p165 = pneg %p79
      $region18: #{_forward_pallas.1} parent=11 // pred_check_branch
        %167 = sbr.rel (%p165) target = $region20
      $region19: #{_forward_pallas.1} parent=11 // pred_region
        _
      $region20: #{_forward_pallas.1} parent=11 // pred_fallthru
        _
      // Predicated region
      $region21: #{_forward_pallas.1} parent=11 // pred_check
        %p168 = pneg %p100
      $region22: #{_forward_pallas.1} parent=11 // pred_check_branch
        %170 = sbr.rel (%p168) target = $region24
      $region23: #{_forward_pallas.1} parent=11 // pred_region
        _
      $region24: #{_forward_pallas.1} parent=11 // pred_fallthru
        _
      // Predicated region
      $region25: #{_forward_pallas.1} parent=11 // pred_check
        %p171 = pneg %p121
      $region26: #{_forward_pallas.1} parent=11 // pred_check_branch
        %173 = sbr.rel (%p171) target = $region28
      $region27: #{_forward_pallas.1} parent=11 // pred_region
        _
      $region28: #{_forward_pallas.1} parent=11 // pred_fallthru
        _
    $region12: #{_forward_pallas.1} parent=5 // pred_fallthru
      _
    %p174 = scmp.lt.s32.totalorder %s11, 2
    // Predicated region
    $region29: #{_forward_pallas.1} parent=5 // pred_check
      %p175 = pneg %p174
    $region30: #{_forward_pallas.1} parent=5 // pred_check_branch
      %177 = sbr.rel (%p175) target = $region32
    $region31: #{_forward_pallas.1} parent=5 // pred_region
      // Predicated region
      $region33: #{_forward_pallas.1} parent=31 // pred_check
        %p178 = pneg %p31
      $region34: #{_forward_pallas.1} parent=31 // pred_check_branch
        %180 = sbr.rel (%p178) target = $region36
      $region35: #{_forward_pallas.1} parent=31 // pred_region
        %s181 = smul.u32 16, %s11
        %p182 = scmp.lt.s32.totalorder %s181, 31
        %s183 = scalar_select %p182, %s181, 31
        %s184 = smul.addr %s183, 8
        %s185 = scalar_lea.vmem %s0, %s184
        %s186 = smul.u32 16, %s11
      $region36: #{_forward_pallas.1} parent=31 // pred_fallthru
        _
    $region32: #{_forward_pallas.1} parent=5 // pred_fallthru
      _
    %p187 = scmp.le.s32.totalorder 1, %s11
    %p188 = scmp.lt.s32.totalorder %s11, 3
    %p189 = pnand %p187, %p188
    %p190 = pneg %p189
    // Predicated region
    $region37: #{_forward_pallas.1} parent=5 // pred_check
      _
    $region38: #{_forward_pallas.1} parent=5 // pred_check_branch
      %192 = sbr.rel (%p189) target = $region40
    $region39: #{_forward_pallas.1} parent=5 // pred_region
      %s193 = ssub.s32 %s11, 1
      %s194 = smul.u32 16, %s16
      %p195 = scmp.lt.s32.totalorder %s194, 31
      %s196 = scalar_select %p195, %s194, 31
      %s197 = smul.addr %s196, 8
      %s198 = scalar_lea.vmem %s0, %s197
      %p199 = pneg %p37
      %p200 = pneg %p34
      %p201 = pneg %p58
      %p202 = pneg %p55
      %p203 = pneg %p79
      %p204 = pneg %p76
      %p205 = pneg %p100
      %p206 = pneg %p97
      %p207 = pneg %p121
      %p208 = pneg %p118
      %p209 = pneg %p147
      %p210 = pneg %p144
      %s211 = smul.u32 16, %s16
      %p212 = scmp.lt.s32.totalorder %s211, 31
      %s213 = scalar_select %p212, %s211, 31
      %s214 = smul.addr %s213, 8
      %s215 = scalar_lea.vmem %s5, %s214
      %s216 = smul.u32 16, %s16
      %p217 = scmp.lt.s32.totalorder %s216, 31
      %s218 = scalar_select %p217, %s216, 31
      %s219 = smul.addr %s218, 8
      %s220 = scalar_lea.vmem %s0, %s219
      %s221 = smul.u32 16, %s16
      %s222 = smul.u32 16, %s16
      %p223 = scmp.lt.s32.totalorder %s222, 31
      %s224 = scalar_select %p223, %s222, 31
      %s225 = smul.addr %s224, 8
      %s226 = scalar_lea.vmem %s5, %s225
      %s227 = smul.u32 16, %s16
      %v229 = vld [vmem:[%s220] sm:$0xff]
      %v230 = vld [vmem:[%s220 + $0x8] sm:$0xff]
      %v231 = vld [vmem:[%s220 + $0x10] sm:$0xff]
      %v232 = vld [vmem:[%s220 + $0x18] sm:$0xff]
      %v233 = vld [vmem:[%s220 + $0x20] sm:$0xff]
      %v234 = vld [vmem:[%s220 + $0x28] sm:$0xff]
      %v235 = vld [vmem:[%s220 + $0x30] sm:$0xff]
      %v236 = vld [vmem:[%s220 + $0x38] sm:$0xff]
      %v237 = vld [vmem:[%s220 + $0x40] sm:$0xff]
      %v238 = vld [vmem:[%s220 + $0x48] sm:$0xff]
      %v239 = vld [vmem:[%s220 + $0x50] sm:$0xff]
      %v240 = vld [vmem:[%s220 + $0x58] sm:$0xff]
      %v241 = vld [vmem:[%s220 + $0x60] sm:$0xff]
      %v242 = vld [vmem:[%s220 + $0x68] sm:$0xff]
      %v243 = vld [vmem:[%s220 + $0x70] sm:$0xff]
      %v244 = vld [vmem:[%s220 + $0x78] sm:$0xff]
      %v245 = vpack.c.bf16 %v230, %v229
      %v246 = vpack.c.bf16 %v232, %v231
      %v247 = vpack.c.bf16 %v234, %v233
      %v248 = vpack.c.bf16 %v236, %v235
      %v249 = vpack.c.bf16 %v238, %v237
      %v250 = vpack.c.bf16 %v240, %v239
      %v251 = vpack.c.bf16 %v242, %v241
      %v252 = vpack.c.bf16 %v244, %v243
      %v253 = vld [vmem:[%s1] sm:$0x3]
      %v254 = vld [vmem:[%s2] sm:$0x1]
      %v256 = vlaneseq
      %v257 = vshrl.u32 %v256, 7
      %v258 = vsub.s32 0, %v257
      %v259 = vrot.slane %v254, %v258
      %vm261 = vcmask 31744
      %v263 = vsel %vm261, %v245, 0
      %v266 = vsel %vm261, %v246, 0
      %v269 = vsel %vm261, %v247, 0
      %v272 = vsel %vm261, %v248, 0
      %v275 = vsel %vm261, %v249, 0
      %v278 = vsel %vm261, %v250, 0
      %v281 = vsel %vm261, %v251, 0
      %v284 = vsel %vm261, %v252, 0
      %vm286 = vcmask 1041408
      %v288 = vsel %vm286, %v253, 0
      %290 = vmatprep.subr.bf16.mxu0 0
      %291 = vmatpush1.bf16.msra.mxu0 0
      %292 = vmatprep.subr.bf16.mxu0 0
      %293 = vmatpush1.bf16.msra.mxu0 0
      %294 = vmatprep.subr.bf16.mxu0 0
      %295 = vmatpush1.bf16.msra.mxu0 0
      %296 = vmatprep.subr.bf16.mxu0 0
      %297 = vmatpush1.bf16.msra.mxu0 0
      %298 = vmatprep.subr.bf16.mxu0 0
      %299 = vmatpush1.bf16.msra.mxu0 0
      %300 = vmatprep.subr.bf16.mxu0 0
      %301 = vmatpush1.bf16.msra.mxu0 0
      %302 = vmatprep.subr.bf16.mxu0 0
      %303 = vmatpush1.bf16.msra.mxu0 0
      %304 = vmatprep.subr.bf16.mxu0 0
      %305 = vmatpush1.bf16.msra.mxu0 %v288
      %306 = vmatprep.subr.bf16.mxu0 0
      %307 = vmatpush2.bf16.msra.mxu0 0
      %308 = vmatprep.subr.bf16.mxu0 0
      %309 = vmatpush2.bf16.msra.mxu0 0
      %310 = vmatprep.subr.bf16.mxu0 0
      %311 = vmatpush2.bf16.msra.mxu0 0
      %312 = vmatprep.subr.bf16.mxu0 0
      %313 = vmatpush2.bf16.msra.mxu0 0
      %314 = vmatprep.subr.bf16.mxu0 0
      %315 = vmatpush2.bf16.msra.mxu0 0
      %316 = vmatprep.subr.bf16.mxu0 0
      %317 = vmatpush2.bf16.msra.mxu0 0
      %318 = vmatprep.subr.bf16.mxu0 0
      %319 = vmatpush2.bf16.msra.mxu0 0
      %320 = vmatprep.subr.bf16.mxu0 0
      %321 = vmatpush2.bf16.msra.mxu0 0
      %322 = vmatprep.mubr.bf16.mxu0 0
      %323 = vmatmul.mubr.bf16.gmra.mxu0 %v263
      %v324 = vpop.f32.mrf.mxu0
      %v325 = vadd.f32 %v259, %v324
      %v326 = vpop.f32.mrf.mxu0
      %v327 = vpop.f32.mrf.mxu0
      %v328 = vadd.f32 %v259, %v327
      %v329 = vpop.f32.mrf.mxu0
      %330 = vmatprep.mubr.bf16.mxu0 0
      %331 = vmatmul.mubr.bf16.gmra.mxu0 %v266
      %v332 = vpop.f32.mrf.mxu0
      %v333 = vadd.f32 %v259, %v332
      %v334 = vpop.f32.mrf.mxu0
      %v335 = vpop.f32.mrf.mxu0
      %v336 = vadd.f32 %v259, %v335
      %v337 = vpop.f32.mrf.mxu0
      %338 = vmatprep.mubr.bf16.mxu0 0
      %339 = vmatmul.mubr.bf16.gmra.mxu0 %v269
      %v340 = vpop.f32.mrf.mxu0
      %v341 = vadd.f32 %v259, %v340
      %v342 = vpop.f32.mrf.mxu0
      %v343 = vpop.f32.mrf.mxu0
      %v344 = vadd.f32 %v259, %v343
      %v345 = vpop.f32.mrf.mxu0
      %346 = vmatprep.mubr.bf16.mxu0 0
      %347 = vmatmul.mubr.bf16.gmra.mxu0 %v272
      %v348 = vpop.f32.mrf.mxu0
      %v349 = vadd.f32 %v259, %v348
      %v350 = vpop.f32.mrf.mxu0
      %v351 = vpop.f32.mrf.mxu0
      %v352 = vadd.f32 %v259, %v351
      %v353 = vpop.f32.mrf.mxu0
      %354 = vmatprep.mubr.bf16.mxu0 0
      %355 = vmatmul.mubr.bf16.gmra.mxu0 %v275
      %v356 = vpop.f32.mrf.mxu0
      %v357 = vadd.f32 %v259, %v356
      %v358 = vpop.f32.mrf.mxu0
      %v359 = vpop.f32.mrf.mxu0
      %v360 = vadd.f32 %v259, %v359
      %v361 = vpop.f32.mrf.mxu0
      %362 = vmatprep.mubr.bf16.mxu0 0
      %363 = vmatmul.mubr.bf16.gmra.mxu0 %v278
      %v364 = vpop.f32.mrf.mxu0
      %v365 = vadd.f32 %v259, %v364
      %v366 = vpop.f32.mrf.mxu0
      %v367 = vpop.f32.mrf.mxu0
      %v368 = vadd.f32 %v259, %v367
      %v369 = vpop.f32.mrf.mxu0
      %370 = vmatprep.mubr.bf16.mxu0 0
      %371 = vmatmul.mubr.bf16.gmra.mxu0 %v281
      %v372 = vpop.f32.mrf.mxu0
      %v373 = vadd.f32 %v259, %v372
      %v374 = vpop.f32.mrf.mxu0
      %v375 = vpop.f32.mrf.mxu0
      %v376 = vadd.f32 %v259, %v375
      %v377 = vpop.f32.mrf.mxu0
      %378 = vmatprep.mubr.bf16.mxu0 0
      %379 = vmatmul.mubr.bf16.gmra.mxu0 %v284
      %v380 = vpop.f32.mrf.mxu0
      %v381 = vadd.f32 %v259, %v380
      %v382 = vpop.f32.mrf.mxu0
      %v383 = vpop.f32.mrf.mxu0
      %v384 = vadd.f32 %v259, %v383
      %v385 = vpop.f32.mrf.mxu0
      %386 = vdwg.mxu0
      %v387 = vmul.f32 %v325, 0.5
      %v388 = vmul.f32 %v328, 0.5
      %v389 = vmul.f32 %v333, 0.5
      %v390 = vmul.f32 %v336, 0.5
      %v391 = vmul.f32 %v341, 0.5
      %v392 = vmul.f32 %v344, 0.5
      %v393 = vmul.f32 %v349, 0.5
      %v394 = vmul.f32 %v352, 0.5
      %v395 = vmul.f32 %v357, 0.5
      %v396 = vmul.f32 %v360, 0.5
      %v397 = vmul.f32 %v365, 0.5
      %v398 = vmul.f32 %v368, 0.5
      %v399 = vmul.f32 %v373, 0.5
      %v400 = vmul.f32 %v376, 0.5
      %v401 = vmul.f32 %v381, 0.5
      %v402 = vmul.f32 %v384, 0.5
      %v403 = vtanh.pop %v387
      %v404 = vtanh.pop %v388
      %v405 = vtanh.pop %v389
      %v406 = vtanh.pop %v390
      %v407 = vtanh.pop %v391
      %v408 = vtanh.pop %v392
      %v409 = vtanh.pop %v393
      %v410 = vtanh.pop %v394
      %v411 = vtanh.pop %v395
      %v412 = vtanh.pop %v396
      %v413 = vtanh.pop %v397
      %v414 = vtanh.pop %v398
      %v415 = vtanh.pop %v399
      %v416 = vtanh.pop %v400
      %v417 = vtanh.pop %v401
      %v418 = vtanh.pop %v402
      %v419 = vmul.f32 %v403, 0.5
      %v420 = vmul.f32 %v404, 0.5
      %v421 = vmul.f32 %v405, 0.5
      %v422 = vmul.f32 %v406, 0.5
      %v423 = vmul.f32 %v407, 0.5
      %v424 = vmul.f32 %v408, 0.5
      %v425 = vmul.f32 %v409, 0.5
      %v426 = vmul.f32 %v410, 0.5
      %v427 = vmul.f32 %v411, 0.5
      %v428 = vmul.f32 %v412, 0.5
      %v429 = vmul.f32 %v413, 0.5
      %v430 = vmul.f32 %v414, 0.5
      %v431 = vmul.f32 %v415, 0.5
      %v432 = vmul.f32 %v416, 0.5
      %v433 = vmul.f32 %v417, 0.5
      %v434 = vmul.f32 %v418, 0.5
      %v435 = vadd.f32 %v419, 0.5
      %v436 = vadd.f32 %v420, 0.5
      %v437 = vadd.f32 %v421, 0.5
      %v438 = vadd.f32 %v422, 0.5
      %v439 = vadd.f32 %v423, 0.5
      %v440 = vadd.f32 %v424, 0.5
      %v441 = vadd.f32 %v425, 0.5
      %v442 = vadd.f32 %v426, 0.5
      %v443 = vadd.f32 %v427, 0.5
      %v444 = vadd.f32 %v428, 0.5
      %v445 = vadd.f32 %v429, 0.5
      %v446 = vadd.f32 %v430, 0.5
      %v447 = vadd.f32 %v431, 0.5
      %v448 = vadd.f32 %v432, 0.5
      %v449 = vadd.f32 %v433, 0.5
      %v450 = vadd.f32 %v434, 0.5
      %v451 = vpack.c.bf16 %v436, %v435
      %v452 = vpack.c.bf16 %v438, %v437
      %v453 = vpack.c.bf16 %v440, %v439
      %v454 = vpack.c.bf16 %v442, %v441
      %v455 = vpack.c.bf16 %v444, %v443
      %v456 = vpack.c.bf16 %v446, %v445
      %v457 = vpack.c.bf16 %v448, %v447
      %v458 = vpack.c.bf16 %v450, %v449
      %v459 = vld [vmem:[%s3] sm:$0xf]
      %v460 = vld [vmem:[%s3 + $0x4] sm:$0xf]
      %v461 = vld [vmem:[%s3 + $0x8] sm:$0xf]
      %v462 = vld [vmem:[%s3 + $0xc] sm:$0xf]
      %v463 = vld [vmem:[%s3 + $0x10] sm:$0xf]
      %v464 = vld [vmem:[%s3 + $0x14] sm:$0xf]
      %v465 = vld [vmem:[%s3 + $0x18] sm:$0xf]
      %v466 = vld [vmem:[%s3 + $0x1c] sm:$0xf]
      %v467 = vld [vmem:[%s3 + $0x20] sm:$0xf]
      %v468 = vld [vmem:[%s3 + $0x24] sm:$0xf]
      %v469 = vld [vmem:[%s3 + $0x28] sm:$0xf]
      %v470 = vld [vmem:[%s3 + $0x2c] sm:$0xf]
      %v471 = vld [vmem:[%s3 + $0x30] sm:$0xf]
      %v472 = vld [vmem:[%s3 + $0x34] sm:$0xf]
      %v473 = vld [vmem:[%s3 + $0x38] sm:$0xf]
      %v474 = vld [vmem:[%s3 + $0x3c] sm:$0xf]
      %v475 = vld [vmem:[%s4] sm:$0x1]
      %v477 = vlaneseq
      %v478 = vshrl.u32 %v477, 7
      %v479 = vsub.s32 0, %v478
      %v480 = vrot.slane %v475, %v479
      %v498 = vunpack.c.l.b16 %v459
      %v499 = vunpack.c.l.b16 %v460
      %v500 = vunpack.c.l.b16 %v461
      %v501 = vunpack.c.l.b16 %v462
      %v502 = vunpack.c.l.b16 %v463
      %v503 = vunpack.c.l.b16 %v464
      %v504 = vunpack.c.l.b16 %v465
      %v505 = vunpack.c.l.b16 %v466
      %v506 = vunpack.c.l.b16 %v467
      %v507 = vunpack.c.l.b16 %v468
      %v508 = vunpack.c.l.b16 %v469
      %v509 = vunpack.c.l.b16 %v470
      %v510 = vunpack.c.l.b16 %v471
      %v511 = vunpack.c.l.b16 %v472
      %v512 = vunpack.c.l.b16 %v473
      %v513 = vunpack.c.l.b16 %v474
      %v514 = vpack.c.b16 %v499, %v498
      %v515 = vpack.c.b16 %v501, %v500
      %v516 = vpack.c.b16 %v503, %v502
      %v517 = vpack.c.b16 %v505, %v504
      %v518 = vpack.c.b16 %v507, %v506
      %v519 = vpack.c.b16 %v509, %v508
      %v520 = vpack.c.b16 %v511, %v510
      %v521 = vpack.c.b16 %v513, %v512
      %530 = vmatprep.subr.bf16.mxu0 0
      %531 = vmatpush1.bf16.msra.mxu0 %v521
      %532 = vmatprep.subr.bf16.mxu0 0
      %533 = vmatpush1.bf16.msra.mxu0 %v520
      %534 = vmatprep.subr.bf16.mxu0 0
      %535 = vmatpush1.bf16.msra.mxu0 %v519
      %536 = vmatprep.subr.bf16.mxu0 0
      %537 = vmatpush1.bf16.msra.mxu0 %v518
      %538 = vmatprep.subr.bf16.mxu0 0
      %539 = vmatpush1.bf16.msra.mxu0 %v517
      %540 = vmatprep.subr.bf16.mxu0 0
      %541 = vmatpush1.bf16.msra.mxu0 %v516
      %542 = vmatprep.subr.bf16.mxu0 0
      %543 = vmatpush1.bf16.msra.mxu0 %v515
      %544 = vmatprep.subr.bf16.mxu0 0
      %545 = vmatpush1.bf16.msra.mxu0 %v514
      %546 = vmatprep.subr.bf16.mxu0 0
      %547 = vmatpush2.bf16.msra.mxu0 0
      %548 = vmatprep.subr.bf16.mxu0 0
      %549 = vmatpush2.bf16.msra.mxu0 0
      %550 = vmatprep.subr.bf16.mxu0 0
      %551 = vmatpush2.bf16.msra.mxu0 0
      %552 = vmatprep.subr.bf16.mxu0 0
      %553 = vmatpush2.bf16.msra.mxu0 0
      %554 = vmatprep.subr.bf16.mxu0 0
      %555 = vmatpush2.bf16.msra.mxu0 0
      %556 = vmatprep.subr.bf16.mxu0 0
      %557 = vmatpush2.bf16.msra.mxu0 0
      %558 = vmatprep.subr.bf16.mxu0 0
      %559 = vmatpush2.bf16.msra.mxu0 0
      %560 = vmatprep.subr.bf16.mxu0 0
      %561 = vmatpush2.bf16.msra.mxu0 0
      %562 = vmatprep.mubr.bf16.mxu0 0
      %563 = vmatmul.mubr.bf16.gmra.mxu0 %v451
      %v564 = vpop.f32.mrf.mxu0
      %v565 = vadd.f32 %v480, %v564
      %v566 = vpop.f32.mrf.mxu0
      %v567 = vpop.f32.mrf.mxu0
      %v568 = vadd.f32 %v480, %v567
      %v569 = vpop.f32.mrf.mxu0
      %570 = vmatprep.mubr.bf16.mxu0 0
      %571 = vmatmul.mubr.bf16.gmra.mxu0 %v452
      %v572 = vpop.f32.mrf.mxu0
      %v573 = vadd.f32 %v480, %v572
      %v574 = vpop.f32.mrf.mxu0
      %v575 = vpop.f32.mrf.mxu0
      %v576 = vadd.f32 %v480, %v575
      %v577 = vpop.f32.mrf.mxu0
      %578 = vmatprep.mubr.bf16.mxu0 0
      %579 = vmatmul.mubr.bf16.gmra.mxu0 %v453
      %v580 = vpop.f32.mrf.mxu0
      %v581 = vadd.f32 %v480, %v580
      %v582 = vpop.f32.mrf.mxu0
      %v583 = vpop.f32.mrf.mxu0
      %v584 = vadd.f32 %v480, %v583
      %v585 = vpop.f32.mrf.mxu0
      %586 = vmatprep.mubr.bf16.mxu0 0
      %587 = vmatmul.mubr.bf16.gmra.mxu0 %v454
      %v588 = vpop.f32.mrf.mxu0
      %v589 = vadd.f32 %v480, %v588
      %v590 = vpop.f32.mrf.mxu0
      %v591 = vpop.f32.mrf.mxu0
      %v592 = vadd.f32 %v480, %v591
      %v593 = vpop.f32.mrf.mxu0
      %594 = vmatprep.mubr.bf16.mxu0 0
      %595 = vmatmul.mubr.bf16.gmra.mxu0 %v455
      %v596 = vpop.f32.mrf.mxu0
      %v597 = vadd.f32 %v480, %v596
      %v598 = vpop.f32.mrf.mxu0
      %v599 = vpop.f32.mrf.mxu0
      %v600 = vadd.f32 %v480, %v599
      %v601 = vpop.f32.mrf.mxu0
      %602 = vmatprep.mubr.bf16.mxu0 0
      %603 = vmatmul.mubr.bf16.gmra.mxu0 %v456
      %v604 = vpop.f32.mrf.mxu0
      %v605 = vadd.f32 %v480, %v604
      %v606 = vpop.f32.mrf.mxu0
      %v607 = vpop.f32.mrf.mxu0
      %v608 = vadd.f32 %v480, %v607
      %v609 = vpop.f32.mrf.mxu0
      %610 = vmatprep.mubr.bf16.mxu0 0
      %611 = vmatmul.mubr.bf16.gmra.mxu0 %v457
      %v612 = vpop.f32.mrf.mxu0
      %v613 = vadd.f32 %v480, %v612
      %v614 = vpop.f32.mrf.mxu0
      %v615 = vpop.f32.mrf.mxu0
      %v616 = vadd.f32 %v480, %v615
      %v617 = vpop.f32.mrf.mxu0
      %618 = vmatprep.mubr.bf16.mxu0 0
      %619 = vmatmul.mubr.bf16.gmra.mxu0 %v458
      %v620 = vpop.f32.mrf.mxu0
      %v621 = vadd.f32 %v480, %v620
      %v622 = vpop.f32.mrf.mxu0
      %v623 = vpop.f32.mrf.mxu0
      %v624 = vadd.f32 %v480, %v623
      %v625 = vpop.f32.mrf.mxu0
      %626 = vdwg.mxu0
      %v627 = vmul.f32 %v565, 0.5
      %v628 = vmul.f32 %v568, 0.5
      %v629 = vmul.f32 %v573, 0.5
      %v630 = vmul.f32 %v576, 0.5
      %v631 = vmul.f32 %v581, 0.5
      %v632 = vmul.f32 %v584, 0.5
      %v633 = vmul.f32 %v589, 0.5
      %v634 = vmul.f32 %v592, 0.5
      %v635 = vmul.f32 %v597, 0.5
      %v636 = vmul.f32 %v600, 0.5
      %v637 = vmul.f32 %v605, 0.5
      %v638 = vmul.f32 %v608, 0.5
      %v639 = vmul.f32 %v613, 0.5
      %v640 = vmul.f32 %v616, 0.5
      %v641 = vmul.f32 %v621, 0.5
      %v642 = vmul.f32 %v624, 0.5
      %v643 = vtanh.pop %v627
      %v644 = vtanh.pop %v628
      %v645 = vtanh.pop %v629
      %v646 = vtanh.pop %v630
      %v647 = vtanh.pop %v631
      %v648 = vtanh.pop %v632
      %v649 = vtanh.pop %v633
      %v650 = vtanh.pop %v634
      %v651 = vtanh.pop %v635
      %v652 = vtanh.pop %v636
      %v653 = vtanh.pop %v637
      %v654 = vtanh.pop %v638
      %v655 = vtanh.pop %v639
      %v656 = vtanh.pop %v640
      %v657 = vtanh.pop %v641
      %v658 = vtanh.pop %v642
      %v659 = vmul.f32 %v643, 0.5
      %v660 = vmul.f32 %v644, 0.5
      %v661 = vmul.f32 %v645, 0.5
      %v662 = vmul.f32 %v646, 0.5
      %v663 = vmul.f32 %v647, 0.5
      %v664 = vmul.f32 %v648, 0.5
      %v665 = vmul.f32 %v649, 0.5
      %v666 = vmul.f32 %v650, 0.5
      %v667 = vmul.f32 %v651, 0.5
      %v668 = vmul.f32 %v652, 0.5
      %v669 = vmul.f32 %v653, 0.5
      %v670 = vmul.f32 %v654, 0.5
      %v671 = vmul.f32 %v655, 0.5
      %v672 = vmul.f32 %v656, 0.5
      %v673 = vmul.f32 %v657, 0.5
      %v674 = vmul.f32 %v658, 0.5
      %v675 = vadd.f32 %v659, 0.5
      %v676 = vadd.f32 %v660, 0.5
      %v677 = vadd.f32 %v661, 0.5
      %v678 = vadd.f32 %v662, 0.5
      %v679 = vadd.f32 %v663, 0.5
      %v680 = vadd.f32 %v664, 0.5
      %v681 = vadd.f32 %v665, 0.5
      %v682 = vadd.f32 %v666, 0.5
      %v683 = vadd.f32 %v667, 0.5
      %v684 = vadd.f32 %v668, 0.5
      %v685 = vadd.f32 %v669, 0.5
      %v686 = vadd.f32 %v670, 0.5
      %v687 = vadd.f32 %v671, 0.5
      %v688 = vadd.f32 %v672, 0.5
      %v689 = vadd.f32 %v673, 0.5
      %v690 = vadd.f32 %v674, 0.5
      %vm691 = vcmask 23552
      %692 = vst.msk [vmem:[%s226] sm:$0xff] %vm691, %v675
      %693 = vst.msk [vmem:[%s226 + $0x8] sm:$0xff] %vm691, %v676
      %694 = vst.msk [vmem:[%s226 + $0x10] sm:$0xff] %vm691, %v677
      %695 = vst.msk [vmem:[%s226 + $0x18] sm:$0xff] %vm691, %v678
      %696 = vst.msk [vmem:[%s226 + $0x20] sm:$0xff] %vm691, %v679
      %697 = vst.msk [vmem:[%s226 + $0x28] sm:$0xff] %vm691, %v680
      %698 = vst.msk [vmem:[%s226 + $0x30] sm:$0xff] %vm691, %v681
      %699 = vst.msk [vmem:[%s226 + $0x38] sm:$0xff] %vm691, %v682
      %700 = vst.msk [vmem:[%s226 + $0x40] sm:$0xff] %vm691, %v683
      %701 = vst.msk [vmem:[%s226 + $0x48] sm:$0xff] %vm691, %v684
      %702 = vst.msk [vmem:[%s226 + $0x50] sm:$0xff] %vm691, %v685
      %703 = vst.msk [vmem:[%s226 + $0x58] sm:$0xff] %vm691, %v686
      %704 = vst.msk [vmem:[%s226 + $0x60] sm:$0xff] %vm691, %v687
      %705 = vst.msk [vmem:[%s226 + $0x68] sm:$0xff] %vm691, %v688
      %706 = vst.msk [vmem:[%s226 + $0x70] sm:$0xff] %vm691, %v689
      %707 = vst.msk [vmem:[%s226 + $0x78] sm:$0xff] %vm691, %v690
      %s708 = smul.u32 16, %s16
      %p709 = scmp.lt.s32.totalorder %s708, 31
      %s710 = scalar_select %p709, %s708, 31
      %s711 = smul.addr %s710, 8
      %s712 = scalar_lea.vmem %s5, %s711
      // Predicated region
      $region41: #{_forward_pallas.1} parent=39 // pred_check
        %p713 = pneg %p144
      $region42: #{_forward_pallas.1} parent=39 // pred_check_branch
        %715 = sbr.rel (%p713) target = $region44
      $region43: #{_forward_pallas.1} parent=39 // pred_region
        %s716 = smul.u32 16, %s16
      $region44: #{_forward_pallas.1} parent=39 // pred_fallthru
        _
    $region40: #{_forward_pallas.1} parent=5 // pred_fallthru
      _
    %p717 = scmp.le.s32.totalorder 2, %s11
    // Predicated region
    $region45: #{_forward_pallas.1} parent=5 // pred_check
      %p718 = pneg %p717
    $region46: #{_forward_pallas.1} parent=5 // pred_check_branch
      %720 = sbr.rel (%p718) target = $region48
    $region47: #{_forward_pallas.1} parent=5 // pred_region
      %s721 = ssub.s32 %s11, 2
      // Predicated region
      $region49: #{_forward_pallas.1} parent=47 // pred_check
        %p722 = pneg %p150
      $region50: #{_forward_pallas.1} parent=47 // pred_check_branch
        %724 = sbr.rel (%p722) target = $region52
      $region51: #{_forward_pallas.1} parent=47 // pred_region
        %s725 = smul.u32 16, %s17
        %p726 = scmp.lt.s32.totalorder %s725, 31
        %s727 = scalar_select %p726, %s725, 31
        %s728 = smul.addr %s727, 8
        %s729 = scalar_lea.vmem %s5, %s728
      $region52: #{_forward_pallas.1} parent=47 // pred_fallthru
        _
    $region48: #{_forward_pallas.1} parent=5 // pred_fallthru
      _
  $region6: #{_forward_pallas.1} parent=0 // loop_footer
    %s15 = sadd.s32 1, %s11
  $region7: #{_forward_pallas.1} parent=0 // loop_footer_branch
    %10 = sbr.rel target = $region3
  $region8: #{_forward_pallas.1} parent=0 // loop_exit
    _

</llo_original>
